<compile_context>
chip_gen: v7x
topology: tpu7x:2x2x1
jax: 0.10.0
libtpu: 0.0.40
codegen_flags: <defaults>
</compile_context>

<pallas_src>
import math
import jax
import jax.numpy as jnp
from jax.experimental import pallas as pl
from jax.experimental.pallas import tpu as pltpu


def _round_up(x, m):
    return (x + m - 1) // m * m


def _tdnn_kernel(x_ref, w_ref, shift_ref, o_ref):
    # x_ref:     (CK, TM)   one tile of unfolded-input columns (col index = n*L + l)
    # w_ref:     (Cout, CK) BN-folded weight (resident across grid steps)
    # shift_ref: (Cout, 1)  folded conv bias + BN shift
    # o_ref:     (Cout, TM) lane-dense output tile
    y = jnp.dot(w_ref[...], x_ref[...], preferred_element_type=jnp.float32)  # MXU
    y = jnp.maximum(y + shift_ref[...], 0.0)                                 # shift + ReLU (VPU)
    o_ref[...] = y.astype(o_ref.dtype)


def tdnn_layer_forward(x, weight, bias, gamma, beta, running_mean, running_var,
                       *, kernel_size, stride=1, padding=0, dilation=1, eps=1e-5,
                       row_tile=2048):
    """x: (N, C_in, T) float32 -> (N, C_out, L) float32 (same as the PyTorch TDNNLayer)."""
    N, Cin, T = x.shape
    Cout, CK = weight.shape
    K = kernel_size
    assert CK == Cin * K

    # --- glue: padding + im2col (matches F.pad + F.unfold ordering: row index = c*K + k) ---
    xp = jnp.pad(x, ((0, 0), (0, 0), (padding, padding)))
    Tp = T + 2 * padding
    L = (Tp - dilation * (K - 1) - 1) // stride + 1
    cols = [xp[:, :, k * dilation: k * dilation + (L - 1) * stride + 1: stride]
            for k in range(K)]                                      # each (N, Cin, L)
    patches = jnp.stack(cols, axis=2)                               # (N, Cin, K, L)
    x_cols = patches.transpose(1, 2, 0, 3).reshape(CK, N * L)       # (CK, M): row=c*K+k, col=n*L+l

    # --- glue: flatten/pad the column dimension to a lane-aligned tile size ---
    M = N * L
    tm = min(_round_up(row_tile, 128), _round_up(M, 128))   # lane-dense tile (multiple of 128)
    M_pad = _round_up(M, tm)
    if M_pad != M:
        x_cols = jnp.pad(x_cols, ((0, 0), (0, M_pad - M)))

    # --- glue: fold conv bias + BatchNorm(eval) into the weight / one shift vector ---
    # y = BN(W x + b) = (W * s[:,None]) x + ((b - mean) * s + beta),  s = gamma / sqrt(var+eps)
    scale = gamma / jnp.sqrt(running_var + eps)
    w_f = (weight * scale[:, None]).astype(jnp.float32)                          # (Cout, CK)
    shift = ((bias - running_mean) * scale + beta).reshape(Cout, 1).astype(jnp.float32)

    out = pl.pallas_call(
        _tdnn_kernel,
        out_shape=jax.ShapeDtypeStruct((Cout, M_pad), x.dtype),
        grid_spec=pltpu.PrefetchScalarGridSpec(
            num_scalar_prefetch=0,
            grid=(M_pad // tm,),
            in_specs=[
                pl.BlockSpec((CK, tm), lambda m: (0, m)),     # streamed input column tiles
                pl.BlockSpec((Cout, CK), lambda m: (0, 0)),   # resident folded weight
                pl.BlockSpec((Cout, 1), lambda m: (0, 0)),    # resident shift
            ],
            out_specs=pl.BlockSpec((Cout, tm), lambda m: (0, m)),
        ),
        compiler_params=pltpu.CompilerParams(dimension_semantics=("parallel",)),
    )(x_cols, w_f, shift)

    # (Cout, M) -> (N, Cout, L): only a leading-dim permute (lane dim L stays contiguous).
    return out[:, :M].reshape(Cout, N, L).transpose(1, 0, 2)


def _reference_forward(x, weight, bias, gamma, beta, running_mean, running_var,
                       *, kernel_size, stride, padding, dilation, eps=1e-5):
    """Plain-JAX reference: conv1d + eval-mode BN + ReLU."""
    Cout, CK = weight.shape
    Cin = x.shape[1]
    w3 = weight.reshape(Cout, Cin, kernel_size)
    y = jax.lax.conv_general_dilated(
        x, w3, window_strides=(stride,), padding=[(padding, padding)],
        rhs_dilation=(dilation,), dimension_numbers=('NCH', 'OIH', 'NCH'))
    y = y + bias[None, :, None]
    y = (y - running_mean[None, :, None]) / jnp.sqrt(running_var[None, :, None] + eps)
    y = y * gamma[None, :, None] + beta[None, :, None]
    return jnp.maximum(y, 0.0)


if __name__ == "__main__":
    # TDNNLayer(in_channels=16, out_channels=32, kernel_size=3, padding=-1) ->
    # padding = (3-1)//2 * 1 = 1
    N, Cin, T = 2, 16, 32
    Cout, K, stride, dilation, padding = 32, 3, 1, 1, 1

    key = jax.random.PRNGKey(0)
    k_x, k_w, k_b, k_g, k_be, k_m, k_v = jax.random.split(key, 7)

    x = jax.random.normal(k_x, (N, Cin, T), dtype=jnp.float32)

    # TimeDelay parameters: weight (Cout, Cin*K), bias (Cout,), init N(0, 1/sqrt(Cout))
    std = 1.0 / math.sqrt(Cout)
    weight = std * jax.random.normal(k_w, (Cout, Cin * K), dtype=jnp.float32)
    bias = std * jax.random.normal(k_b, (Cout,), dtype=jnp.float32)

    # BatchNorm1d(Cout) parameters / running stats (deterministic, non-trivial)
    gamma = 1.0 + 0.1 * jax.random.normal(k_g, (Cout,), dtype=jnp.float32)
    beta = 0.1 * jax.random.normal(k_be, (Cout,), dtype=jnp.float32)
    running_mean = 0.1 * jax.random.normal(k_m, (Cout,), dtype=jnp.float32)
    running_var = 1.0 + 0.1 * jax.random.uniform(k_v, (Cout,), dtype=jnp.float32)

    out = tdnn_layer_forward(
        x, weight, bias, gamma, beta, running_mean, running_var,
        kernel_size=K, stride=stride, padding=padding, dilation=dilation)
    out = jax.block_until_ready(out)

    ref = _reference_forward(
        x, weight, bias, gamma, beta, running_mean, running_var,
        kernel_size=K, stride=stride, padding=padding, dilation=dilation)

    L = (T + 2 * padding - dilation * (K - 1) - 1) // stride + 1
    assert out.shape == (N, Cout, L)
    assert jnp.allclose(out, ref, atol=1e-4, rtol=1e-4), "mismatch vs reference"
    print("KERNEL_OK")
</pallas_src>

<mosaic_0001>
module attributes {stable_mosaic.version = 11 : i64} {
  func.func @_tdnn_kernel(%arg0: i32, %arg1: memref<48x128xf32, #tpu.memory_space<vmem>>, %arg2: memref<32x48xf32, #tpu.memory_space<vmem>>, %arg3: memref<32x1xf32, #tpu.memory_space<vmem>>, %arg4: memref<32x128xf32, #tpu.memory_space<vmem>>) attributes {dimension_semantics = [#tpu.dimension_semantics<parallel>], iteration_bounds = array<i64: 1>, scalar_prefetch = 0 : i64, scratch_operands = 0 : i64, tpu.core_type = #tpu.core_type<tc>, window_params = [{transform_indices = @transform_0, window_bounds = array<i64: 48, 128>}, {pipeline_mode = #tpu.pipeline_mode<synchronous>, transform_indices = @transform_1, window_bounds = array<i64: 32, 48>}, {pipeline_mode = #tpu.pipeline_mode<synchronous>, transform_indices = @transform_2, window_bounds = array<i64: 32, 1>}, {transform_indices = @transform_3, window_bounds = array<i64: 32, 128>}]} {
    %c0 = arith.constant 0 : index
    %c0_0 = arith.constant 0 : index
    %0 = vector.load %arg2[%c0, %c0_0] : memref<32x48xf32, #tpu.memory_space<vmem>>, vector<32x48xf32>
    %c0_1 = arith.constant 0 : index
    %c0_2 = arith.constant 0 : index
    %1 = vector.load %arg1[%c0_1, %c0_2] : memref<48x128xf32, #tpu.memory_space<vmem>>, vector<48x128xf32>
    %cst = arith.constant dense<0.000000e+00> : vector<32x128xf32>
    %2 = tpu.matmul %0, %1, %cst {dimension_numbers = #tpu.dot_dimension_numbers<[1], [0], [0], [1], [0, 0, 1, 1], [], []>} : vector<32x48xf32>, vector<48x128xf32>, vector<32x128xf32> -> vector<32x128xf32>
    %c0_3 = arith.constant 0 : index
    %c0_4 = arith.constant 0 : index
    %3 = vector.load %arg3[%c0_3, %c0_4] : memref<32x1xf32, #tpu.memory_space<vmem>>, vector<32x1xf32>
    %4 = vector.broadcast %3 : vector<32x1xf32> to vector<32x128xf32>
    %5 = arith.addf %2, %4 : vector<32x128xf32>
    %cst_5 = arith.constant 0.000000e+00 : f32
    %6 = vector.broadcast %cst_5 : f32 to vector<32x128xf32>
    %7 = arith.maximumf %5, %6 : vector<32x128xf32>
    %c0_6 = arith.constant 0 : index
    %c0_7 = arith.constant 0 : index
    %8 = vector.load %arg4[%c0_6, %c0_7] : memref<32x128xf32, #tpu.memory_space<vmem>>, vector<32x128xf32>
    tpu.vector_store %arg4[%c0_6, %c0_7], %7 {strides = array<i32>} : memref<32x128xf32, #tpu.memory_space<vmem>>, vector<32x128xf32>,
    return
  }
  func.func @transform_0(%arg0: i32) -> (i32, i32) {
    %c0_i32 = arith.constant 0 : i32
    %c0_i32_0 = arith.constant 0 : i32
    return %c0_i32, %arg0 : i32, i32
  }
  func.func @transform_1(%arg0: i32) -> (i32, i32) {
    %c0_i32 = arith.constant 0 : i32
    %c0_i32_0 = arith.constant 0 : i32
    %c0_i32_1 = arith.constant 0 : i32
    return %c0_i32, %c0_i32_0 : i32, i32
  }
  func.func @transform_2(%arg0: i32) -> (i32, i32) {
    %c0_i32 = arith.constant 0 : i32
    %c0_i32_0 = arith.constant 0 : i32
    %c0_i32_1 = arith.constant 0 : i32
    return %c0_i32, %c0_i32_0 : i32, i32
  }
  func.func @transform_3(%arg0: i32) -> (i32, i32) {
    %c0_i32 = arith.constant 0 : i32
    %c0_i32_0 = arith.constant 0 : i32
    return %c0_i32, %arg0 : i32, i32
  }
}

</mosaic_0001>

<llo_original>
// kernel: tpu_custom_call.1
$region0: #{tpu_custom_call.1}
  #allocation0 [shape = 'u32[]', space=smem, size = 0x4, offset = 0x4, fixed_abs, tag = 'smem constant byte address 0x4 - core index']
  #allocation1 [shape = 'u32[144,128]{1,0:T(1,128)}', space=vmem, size = 0x12000, scoped, tag = 'internal scratch']
  %s0 = inlined_call_operand.hbm [shape: f32[48,128], index: 0, kind: input, shape index: {}]
  %s1 = inlined_call_operand.vmem [shape: f32[32,48], index: 1, kind: input, shape index: {}]
  %s2 = inlined_call_operand.vmem [shape: f32[32,1], index: 2, kind: input, shape index: {}]
  %s3 = inlined_call_operand.hbm [shape: f32[32,128], index: 3, kind: output, shape index: {}]
  %s4 = sld [smem:[#allocation0]]
  $region26: #{tpu_custom_call.1} parent=0
    _
  %s6 = ssub.s32 1, %s4
  %s7 = scalar_select 0, %s6, %s4
  $region1: #{tpu_custom_call.1} parent=0
    #allocation2 [shape = 'u8[24576]{0}', space=vmem, size = 0x6000, scoped, tag = 'input window, operand 0, single buffered']
    #allocation3 [shape = 's32[1]{0}', space=sflag, size = 0x4, scoped, tag = 'scoped memory for tpu_custom_call.1']
    #allocation4 [shape = 's32[1]{0}', space=sflag, size = 0x4, scoped, tag = 'scoped memory for tpu_custom_call.1']
    #allocation5 [shape = 'u8[16384]{0}', space=vmem, size = 0x4000, scoped, tag = 'output window, operand 0, single buffered']
    %8 = vsyncpa [#allocation3], 0
    %9 = vsyncpa [#allocation4], 0
    // Predicated region
    $region2: #{tpu_custom_call.1} parent=1 // pred_check
      _
    $region3: #{tpu_custom_call.1} parent=1 // pred_check_branch
      %11 = sbr.rel (0) target = $region5
    $region4: #{tpu_custom_call.1} parent=1 // pred_region
      %s13 = ssub.s32 768, 768
      %14 = vsyncadd [#allocation3], %s13
      %s15 = sshll.u32 [#allocation2], 4
      %s16 = int_to_ptr.vmem [resolvable:$true] %s15
      %21 = dma.hbm_to_vmem [thread:$0]  %s0, 768, %s16, [#allocation3], 128, 128, 8
    $region5: #{tpu_custom_call.1} parent=1 // pred_fallthru
      _
    // Predicated region
    $region6: #{tpu_custom_call.1} parent=1 // pred_check
      _
    $region7: #{tpu_custom_call.1} parent=1 // pred_check_branch
      %23 = sbr.rel (0) target = $region9
    $region8: #{tpu_custom_call.1} parent=1 // pred_region
      _
    $region9: #{tpu_custom_call.1} parent=1 // pred_fallthru
      _
    // Predicated region
    $region10: #{tpu_custom_call.1} parent=1 // pred_check
      _
    $region11: #{tpu_custom_call.1} parent=1 // pred_check_branch
      %25 = sbr.rel (0) target = $region13
    $region12: #{tpu_custom_call.1} parent=1 // pred_region
      _
    $region13: #{tpu_custom_call.1} parent=1 // pred_fallthru
      _
    // Predicated region
    $region14: #{tpu_custom_call.1} parent=1 // pred_check
      _
    $region15: #{tpu_custom_call.1} parent=1 // pred_check_branch
      %27 = sbr.rel (0) target = $region17
    $region16: #{tpu_custom_call.1} parent=1 // pred_region
      %28 = dma.done [#allocation3], 768
    $region17: #{tpu_custom_call.1} parent=1 // pred_fallthru
      _
    %v29 = vld [vmem:[%s1] sm:$0xff]
    %v30 = vld [vmem:[%s1 + $0x8] sm:$0xff]
    %v31 = vld [vmem:[%s1 + $0x10] sm:$0xff]
    %v32 = vld [vmem:[%s1 + $0x18] sm:$0xff]
    %v33 = vld [vmem:[#allocation2] sm:$0xff]
    %v34 = vld [vmem:[#allocation2 + $0x8] sm:$0xff]
    %v35 = vld [vmem:[#allocation2 + $0x10] sm:$0xff]
    %v36 = vld [vmem:[#allocation2 + $0x18] sm:$0xff]
    %v37 = vld [vmem:[#allocation2 + $0x20] sm:$0xff]
    %v38 = vld [vmem:[#allocation2 + $0x28] sm:$0xff]
    %v39 = vld [vmem:[%s2] sm:$0xff]
    %v40 = vld [vmem:[%s2 + $0x8] sm:$0xff]
    %v41 = vld [vmem:[%s2 + $0x10] sm:$0xff]
    %v42 = vld [vmem:[%s2 + $0x18] sm:$0xff]
    %44 = vset.pattern.permute.xlu0 0
    %45 = vperm.xlu0 %44, %v39
    %v46 = vpop.permute.xlu0 %45
    %49 = vset.pattern.permute.xlu0 0
    %50 = vperm.xlu0 %49, %v40
    %v51 = vpop.permute.xlu0 %50
    %54 = vset.pattern.permute.xlu0 0
    %55 = vperm.xlu0 %54, %v41
    %v56 = vpop.permute.xlu0 %55
    %59 = vset.pattern.permute.xlu0 0
    %60 = vperm.xlu0 %59, %v42
    %v61 = vpop.permute.xlu0 %60
    %vm63 = vcmask 392192
    %v65 = vsel %vm63, %v29, 0
    %v68 = vsel %vm63, %v30, 0
    %v71 = vsel %vm63, %v31, 0
    %v74 = vsel %vm63, %v32, 0
    %76 = vmatprep.subr.mxu0 0.0
    %77 = vmatpush1.msra.mxu0 %v33
    %78 = vmatprep.subr.mxu0 0.0
    %79 = vmatpush1.msra.mxu0 %v34
    %80 = vmatprep.subr.mxu0 0.0
    %81 = vmatpush1.msra.mxu0 %v35
    %82 = vmatprep.subr.mxu0 0.0
    %83 = vmatpush1.msra.mxu0 %v36
    %84 = vmatprep.subr.mxu0 0.0
    %85 = vmatpush1.msra.mxu0 %v37
    %86 = vmatprep.subr.mxu0 0.0
    %87 = vmatpush1.msra.mxu0 %v38
    %88 = vmatprep.subr.mxu0 0.0
    %89 = vmatpush1.msra.mxu0 0.0
    %90 = vmatprep.subr.mxu0 0.0
    %91 = vmatpush1.msra.mxu0 0.0
    %92 = vmatprep.subr.mxu0 0.0
    %93 = vmatpush1.msra.mxu0 0.0
    %94 = vmatprep.subr.mxu0 0.0
    %95 = vmatpush1.msra.mxu0 0.0
    %96 = vmatprep.subr.mxu0 0.0
    %97 = vmatpush1.msra.mxu0 0.0
    %98 = vmatprep.subr.mxu0 0.0
    %99 = vmatpush1.msra.mxu0 0.0
    %100 = vmatprep.subr.mxu0 0.0
    %101 = vmatpush1.msra.mxu0 0.0
    %102 = vmatprep.subr.mxu0 0.0
    %103 = vmatpush1.msra.mxu0 0.0
    %104 = vmatprep.subr.mxu0 0.0
    %105 = vmatpush1.msra.mxu0 0.0
    %106 = vmatprep.subr.mxu0 0.0
    %107 = vmatpush1.msra.mxu0 0.0
    %108 = vmatprep.subr.mxu0 0.0
    %109 = vmatpush1.msra.mxu0 0.0
    %110 = vmatprep.subr.mxu0 0.0
    %111 = vmatpush1.msra.mxu0 0.0
    %112 = vmatprep.subr.mxu0 0.0
    %113 = vmatpush1.msra.mxu0 0.0
    %114 = vmatprep.subr.mxu0 0.0
    %115 = vmatpush1.msra.mxu0 0.0
    %116 = vmatprep.subr.mxu0 0.0
    %117 = vmatpush1.msra.mxu0 0.0
    %118 = vmatprep.subr.mxu0 0.0
    %119 = vmatpush1.msra.mxu0 0.0
    %120 = vmatprep.subr.mxu0 0.0
    %121 = vmatpush1.msra.mxu0 0.0
    %122 = vmatprep.subr.mxu0 0.0
    %123 = vmatpush1.msra.mxu0 0.0
    %124 = vmatprep.subr.mxu0 0.0
    %125 = vmatpush1.msra.mxu0 0.0
    %126 = vmatprep.subr.mxu0 0.0
    %127 = vmatpush1.msra.mxu0 0.0
    %128 = vmatprep.subr.mxu0 0.0
    %129 = vmatpush1.msra.mxu0 0.0
    %130 = vmatprep.subr.mxu0 0.0
    %131 = vmatpush1.msra.mxu0 0.0
    %132 = vmatprep.subr.mxu0 0.0
    %133 = vmatpush1.msra.mxu0 0.0
    %134 = vmatprep.subr.mxu0 0.0
    %135 = vmatpush1.msra.mxu0 0.0
    %136 = vmatprep.subr.mxu0 0.0
    %137 = vmatpush1.msra.mxu0 0.0
    %138 = vmatprep.subr.mxu0 0.0
    %139 = vmatpush1.msra.mxu0 0.0
    %140 = vmatprep.mubr.f32.mxu0 0.0
    %141 = vmatmul.mubr.f32.gmra.mrb[0].mxu0 %v65
    %v142 = vpop.f32.mrb[0].mxu0
    %v143 = vadd.f32 %v46, %v142
    %v144 = vpop.f32.mrb[0].mxu0
    %145 = vmatprep.mubr.f32.mxu0 0.0
    %146 = vmatmul.mubr.f32.gmra.mrb[0].mxu0 %v68
    %v147 = vpop.f32.mrb[0].mxu0
    %v148 = vadd.f32 %v51, %v147
    %v149 = vpop.f32.mrb[0].mxu0
    %150 = vmatprep.mubr.f32.mxu0 0.0
    %151 = vmatmul.mubr.f32.gmra.mrb[0].mxu0 %v71
    %v152 = vpop.f32.mrb[0].mxu0
    %v153 = vadd.f32 %v56, %v152
    %v154 = vpop.f32.mrb[0].mxu0
    %155 = vmatprep.mubr.f32.mxu0 0.0
    %156 = vmatmul.mubr.f32.gmra.mrb[0].mxu0 %v74
    %v157 = vpop.f32.mrb[0].mxu0
    %v158 = vadd.f32 %v61, %v157
    %v159 = vpop.f32.mrb[0].mxu0
    %160 = vdwg.mxu0
    %v161 = vmax.f32 %v143, 0.0
    %v162 = vmax.f32 %v148, 0.0
    %v163 = vmax.f32 %v153, 0.0
    %v164 = vmax.f32 %v158, 0.0
    %165 = vst [vmem:[#allocation5] sm:$0xff] %v161
    %166 = vst [vmem:[#allocation5 + $0x8] sm:$0xff] %v162
    %167 = vst [vmem:[#allocation5 + $0x10] sm:$0xff] %v163
    %168 = vst [vmem:[#allocation5 + $0x18] sm:$0xff] %v164
    // Predicated region
    $region18: #{tpu_custom_call.1} parent=1 // pred_check
      _
    $region19: #{tpu_custom_call.1} parent=1 // pred_check_branch
      %170 = sbr.rel (0) target = $region21
    $region20: #{tpu_custom_call.1} parent=1 // pred_region
      %s172 = ssub.s32 512, 512
      %173 = vsyncadd [#allocation4], %s172
      %s174 = sshll.u32 [#allocation5], 4
      %s175 = int_to_ptr.vmem [resolvable:$true] %s174
      %180 = dma.vmem_to_hbm [thread:$0]  %s175, 512, %s3, [#allocation4], 128, 128, 8
    $region21: #{tpu_custom_call.1} parent=1 // pred_fallthru
      _
    // Predicated region
    $region22: #{tpu_custom_call.1} parent=1 // pred_check
      _
    $region23: #{tpu_custom_call.1} parent=1 // pred_check_branch
      %182 = sbr.rel (0) target = $region25
    $region24: #{tpu_custom_call.1} parent=1 // pred_region
      %183 = dma.done [#allocation4], 512
    $region25: #{tpu_custom_call.1} parent=1 // pred_fallthru
      _
    %184 = vsyncpa [#allocation3], 1
    %185 = vsyncpa [#allocation4], 1

</llo_original>
